<compile_context>
chip_gen: v5e
topology: v5e:2x2
jax: 0.10.0
libtpu: 0.0.40
codegen_flags: <defaults>
</compile_context>

<pallas_src>
import functools

import jax
import jax.numpy as jnp
from jax.experimental import pallas as pl
from jax.experimental.pallas import tpu as pltpu


_BISECT_ITERS = 24  # threshold resolution ~ (max_ce + 2) * 2^-24; exact boundary snap
                    # afterwards removes any residual bias from the tie correction.


def _ce_loss_hnm_kernel(x_loc_ref, x_conf_ref, y_ref, out_ref,
                        *, num_priors: int, negpos_ratio: int):
    # Per-step refs (B = images per block, packed on the sublane/outer axis):
    #   x_loc_ref : (B, 4, Ppad)   predicted box regressions
    #   x_conf_ref: (B, C, Ppad)   class logits (native dtype, e.g. bf16 or f32)
    #   y_ref     : (B, 5, Ppad)   row 0 = matched class id, rows 1:5 = loc targets
    #   out_ref   : (B, 128) VMEM  lanes [0,1,2] = [loc_loss, conf_loss, num_pos]
    B, C, Ppad = x_conf_ref.shape

    x_conf = x_conf_ref[...]                               # native dtype
    x_loc = x_loc_ref[...].astype(jnp.float32)             # (B, 4, Ppad)
    y_loc = y_ref[:, 1:5, :].astype(jnp.float32)           # (B, 4, Ppad)

    lane = jax.lax.broadcasted_iota(jnp.int32, (1, Ppad), 1)
    valid = lane < num_priors                               # mask out lane padding

    # Class ids: round-half-up (labels >= 0) to be robust to float-stored ids.
    labels2 = (y_ref[:, 0, :].astype(jnp.float32) + 0.5).astype(jnp.int32)    # (B, Ppad)
    labels3 = (y_ref[:, 0:1, :].astype(jnp.float32) + 0.5).astype(jnp.int32)  # (B, 1, Ppad)

    # -------- positive mask -------------------------------------------------
    pos = jnp.logical_and(labels2 > 0, valid)               # (B, Ppad)
    posf = pos.astype(jnp.float32)
    num_pos = jnp.sum(posf, axis=-1, keepdims=True)         # (B, 1)

    # -------- localization loss: smooth-L1 (beta=1), summed over positives --
    diff = x_loc - y_loc
    ad = jnp.abs(diff)
    sl1 = jnp.where(ad < 1.0, 0.5 * diff * diff, ad - 0.5)  # (B, 4, Ppad)
    per_prior_l1 = jnp.sum(sl1, axis=1)                     # (B, Ppad)
    loss_loc = jnp.sum(per_prior_l1 * posf, axis=-1, keepdims=True)   # (B, 1)

    # -------- per-prior softmax cross-entropy (class axis on sublanes) ------
    # max / subtract / label-select in native dtype; exp & accumulation in f32.
    m = jnp.max(x_conf, axis=1, keepdims=True)              # (B, 1, Ppad)
    ez = jnp.exp((x_conf - m).astype(jnp.float32))          # (B, C, Ppad) f32
    lse = jnp.log(jnp.sum(ez, axis=1)) + m[:, 0, :].astype(jnp.float32)  # (B, Ppad)
    cls_iota = jax.lax.broadcasted_iota(jnp.int32, (1, C, Ppad), 1)
    logit_at_label = jnp.sum(
        jnp.where(cls_iota == labels3, x_conf, 0), axis=1).astype(jnp.float32)  # (B, Ppad)
    ce = jnp.where(valid, lse - logit_at_label, 0.0)        # (B, Ppad), 0 on lane pad

    # -------- hard negative mining: per-row threshold bisection -------------
    # l[pos] = 0 and padded lanes are already 0 -> they never displace a real
    # negative and contribute 0 even if tied at the boundary.
    l = jnp.where(pos, 0.0, ce)                             # (B, Ppad)
    num_neg = jnp.minimum(jnp.float32(negpos_ratio) * num_pos,
                          jnp.float32(num_priors - 1))      # (B, 1)

    lo0 = jnp.full((B, 1), -1.0, jnp.float32)               # count(l > lo) >  num_neg
    hi0 = jnp.max(l, axis=-1, keepdims=True) + 1.0          # count(l > hi) <= num_neg

    def body(_, carry):
        lo, hi = carry
        mid = 0.5 * (lo + hi)                               # (B, 1)
        cnt = jnp.sum((l > mid).astype(jnp.float32), axis=-1, keepdims=True)
        gt = cnt > num_neg
        return jnp.where(gt, mid, lo), jnp.where(gt, hi, mid)

    _, hi = jax.lax.fori_loop(0, _BISECT_ITERS, body, (lo0, hi0))

    strict = l > hi                                         # strictly above boundary
    strictf = strict.astype(jnp.float32)
    n_strict = jnp.sum(strictf, axis=-1, keepdims=True)     # (B, 1)
    hard_neg_sum = jnp.sum(l * strictf, axis=-1, keepdims=True)
    # Exact boundary snap: largest non-strict CE value (l >= 0, so the extra zeros
    # injected for strict entries never exceed it).
    boundary = jnp.max(jnp.where(strict, 0.0, l), axis=-1, keepdims=True)
    # Entries tied at the boundary: exactly (num_neg - n_strict) of them are selected
    # by the reference sort; they all share the same CE, so only the count matters.
    r = jnp.maximum(num_neg - n_strict, 0.0)

    loss_conf = (jnp.sum(ce * posf, axis=-1, keepdims=True)
                 + hard_neg_sum + r * boundary)             # (B, 1)

    # -------- lane-dense per-image partial output ---------------------------
    lane_out = jax.lax.broadcasted_iota(jnp.int32, (B, 128), 1)
    tile = jnp.where(lane_out == 0, loss_loc,
           jnp.where(lane_out == 1, loss_conf,
           jnp.where(lane_out == 2, num_pos, 0.0)))
    out_ref[...] = tile


def ce_loss_hnm(x_loc, x_conf, y, *, num_classes, negpos_ratio=3,
                block_images=8, vmem_limit_bytes=40 * 1024 * 1024):
    """JAX/Pallas equivalent of CE_loss_hnm.forward.

    x_loc : (N, P, 4) float
    x_conf: (N, P, num_classes) float
    y     : (N, P, 5), already matched; y[:,:,0] = class id, y[:,:,1:] = loc target
    returns (loss_loc, loss_conf) scalars (both 0.0 when there are no positives,
    matching the PyTorch early-return).
    """
    N, P, _ = x_loc.shape
    assert x_conf.shape == (N, P, num_classes)
    assert y.shape[0] == N and y.shape[1] == P and y.shape[2] >= 5
    assert block_images % 8 == 0, "image block must be a multiple of 8 sublanes"

    b_img = block_images
    n_total = ((N + b_img - 1) // b_img) * b_img
    n_pad = n_total - N
    ppad_total = max(128, ((P + 127) // 128) * 128)
    p_pad = ppad_total - P

    # Lane-dense layout: priors on the 128-lane axis; pad batch to a multiple of
    # b_img (padded images are all-background and contribute exactly 0).
    def prep(a):
        return jnp.pad(jnp.moveaxis(a, 1, 2), ((0, n_pad), (0, 0), (0, p_pad)))

    x_loc_t = prep(x_loc)                    # (Ntot, 4, Ppad)
    x_conf_t = prep(x_conf)                  # (Ntot, C, Ppad)
    y_t = prep(y[:, :, :5])                  # (Ntot, 5, Ppad)  labels + loc targets

    grid_n = n_total // b_img

    kernel = functools.partial(_ce_loss_hnm_kernel,
                               num_priors=P, negpos_ratio=negpos_ratio)

    parts = pl.pallas_call(
        kernel,
        out_shape=jax.ShapeDtypeStruct((n_total, 128), jnp.float32),
        grid=(grid_n,),
        in_specs=[
            pl.BlockSpec((b_img, 4, ppad_total), lambda n: (n, 0, 0)),
            pl.BlockSpec((b_img, num_classes, ppad_total), lambda n: (n, 0, 0)),
            pl.BlockSpec((b_img, 5, ppad_total), lambda n: (n, 0, 0)),
        ],
        out_specs=pl.BlockSpec((b_img, 128), lambda n: (n, 0)),
        compiler_params=pltpu.CompilerParams(
            dimension_semantics=("parallel",),
            vmem_limit_bytes=vmem_limit_bytes),
    )(x_loc_t, x_conf_t, y_t)

    loc_sum = jnp.sum(parts[:, 0])
    conf_sum = jnp.sum(parts[:, 1])
    pos_sum = jnp.sum(parts[:, 2])

    has_pos = (pos_sum > 0.0).astype(jnp.float32)
    denom = jnp.where(pos_sum > 0.0, pos_sum, 1.0)
    loss_loc = loc_sum / denom * has_pos
    loss_conf = conf_sum / denom * has_pos
    return loss_loc, loss_conf


if __name__ == "__main__":
    key = jax.random.PRNGKey(0)
    N, P, C = 2, 16, 4          # batch, priors, num_classes

    k1, k2, k3, k4 = jax.random.split(key, 4)
    x_loc = jax.random.normal(k1, (N, P, 4), dtype=jnp.float32)
    x_conf = jax.random.normal(k2, (N, P, C), dtype=jnp.float32)

    # Synthetic already-matched targets: some positives per image, rest background (0).
    labels = jax.random.randint(k3, (N, P), 0, C)
    y_loc_t = jax.random.normal(k4, (N, P, 4), dtype=jnp.float32) * 0.1
    y = jnp.concatenate([labels[:, :, None].astype(jnp.float32), y_loc_t], axis=-1)

    loss_loc, loss_conf = ce_loss_hnm(x_loc, x_conf, y, num_classes=C, negpos_ratio=3)
    jax.block_until_ready((loss_loc, loss_conf))
    print("KERNEL_OK")
</pallas_src>

<mosaic_0001>
module attributes {stable_mosaic.version = 11 : i64} {
  func.func @_ce_loss_hnm_kernel(%arg0: i32, %arg1: memref<8x4x128xf32, #tpu.memory_space<vmem>>, %arg2: memref<8x4x128xf32, #tpu.memory_space<vmem>>, %arg3: memref<8x5x128xf32, #tpu.memory_space<vmem>>, %arg4: memref<8x128xf32, #tpu.memory_space<vmem>>) attributes {dimension_semantics = [#tpu.dimension_semantics<parallel>], iteration_bounds = array<i64: 1>, scalar_prefetch = 0 : i64, scratch_operands = 0 : i64, tpu.core_type = #tpu.core_type<tc>, window_params = [{transform_indices = @transform_0, window_bounds = array<i64: 8, 4, 128>}, {transform_indices = @transform_1, window_bounds = array<i64: 8, 4, 128>}, {transform_indices = @transform_2, window_bounds = array<i64: 8, 5, 128>}, {transform_indices = @transform_3, window_bounds = array<i64: 8, 128>}]} {
    %c0 = arith.constant 0 : index
    %c0_0 = arith.constant 0 : index
    %c0_1 = arith.constant 0 : index
    %0 = vector.load %arg2[%c0, %c0_0, %c0_1] : memref<8x4x128xf32, #tpu.memory_space<vmem>>, vector<8x4x128xf32>
    %c0_2 = arith.constant 0 : index
    %c0_3 = arith.constant 0 : index
    %c0_4 = arith.constant 0 : index
    %1 = vector.load %arg1[%c0_2, %c0_3, %c0_4] : memref<8x4x128xf32, #tpu.memory_space<vmem>>, vector<8x4x128xf32>
    %c0_5 = arith.constant 0 : index
    %c1 = arith.constant 1 : index
    %c0_6 = arith.constant 0 : index
    %2 = vector.load %arg3[%c0_5, %c1, %c0_6] : memref<8x5x128xf32, #tpu.memory_space<vmem>>, vector<8x4x128xf32>
    %3 = tpu.iota {dimensions = array<i32: 1>} : vector<1x128xi32>
    %c16_i32 = arith.constant 16 : i32
    %4 = vector.broadcast %c16_i32 : i32 to vector<1x128xi32>
    %5 = arith.cmpi slt, %3, %4 : vector<1x128xi32>
    %c0_7 = arith.constant 0 : index
    %c0_8 = arith.constant 0 : index
    %c0_9 = arith.constant 0 : index
    %6 = vector.load %arg3[%c0_7, %c0_8, %c0_9] : memref<8x5x128xf32, #tpu.memory_space<vmem>>, vector<8x1x128xf32>
    %7 = vector.shape_cast %6 : vector<8x1x128xf32> to vector<8x128xf32>
    %cst = arith.constant 5.000000e-01 : f32
    %8 = vector.broadcast %cst : f32 to vector<8x128xf32>
    %9 = arith.addf %7, %8 : vector<8x128xf32>
    %10 = arith.fptosi %9 : vector<8x128xf32> to vector<8x128xi32>
    %c0_10 = arith.constant 0 : index
    %c0_11 = arith.constant 0 : index
    %c0_12 = arith.constant 0 : index
    %11 = vector.load %arg3[%c0_10, %c0_11, %c0_12] : memref<8x5x128xf32, #tpu.memory_space<vmem>>, vector<8x1x128xf32>
    %cst_13 = arith.constant 5.000000e-01 : f32
    %12 = vector.broadcast %cst_13 : f32 to vector<8x1x128xf32>
    %13 = arith.addf %11, %12 : vector<8x1x128xf32>
    %14 = arith.fptosi %13 : vector<8x1x128xf32> to vector<8x1x128xi32>
    %c0_i32 = arith.constant 0 : i32
    %15 = vector.broadcast %c0_i32 : i32 to vector<8x128xi32>
    %16 = arith.cmpi sgt, %10, %15 : vector<8x128xi32>
    %17 = vector.broadcast %5 : vector<1x128xi1> to vector<8x128xi1>
    %18 = arith.andi %16, %17 : vector<8x128xi1>
    %19 = arith.extui %18 : vector<8x128xi1> to vector<8x128xi32>
    %20 = arith.sitofp %19 : vector<8x128xi32> to vector<8x128xf32>
    %cst_14 = arith.constant dense<0.000000e+00> : vector<8xf32>
    %21 = vector.multi_reduction <add>, %20, %cst_14 [1] : vector<8x128xf32> to vector<8xf32>
    %22 = vector.shape_cast %21 : vector<8xf32> to vector<8x1xf32>
    %23 = arith.subf %1, %2 : vector<8x4x128xf32>
    %24 = math.absf %23 : vector<8x4x128xf32>
    %cst_15 = arith.constant 1.000000e+00 : f32
    %25 = vector.broadcast %cst_15 : f32 to vector<8x4x128xf32>
    %26 = arith.cmpf olt, %24, %25 : vector<8x4x128xf32>
    %cst_16 = arith.constant 5.000000e-01 : f32
    %27 = vector.broadcast %cst_16 : f32 to vector<8x4x128xf32>
    %28 = arith.mulf %27, %23 : vector<8x4x128xf32>
    %29 = arith.mulf %28, %23 : vector<8x4x128xf32>
    %cst_17 = arith.constant 5.000000e-01 : f32
    %30 = vector.broadcast %cst_17 : f32 to vector<8x4x128xf32>
    %31 = arith.subf %24, %30 : vector<8x4x128xf32>
    %32 = arith.select %26, %29, %31 : vector<8x4x128xi1>, vector<8x4x128xf32>
    %cst_18 = arith.constant dense<0.000000e+00> : vector<8x128xf32>
    %33 = vector.multi_reduction <add>, %32, %cst_18 [1] : vector<8x4x128xf32> to vector<8x128xf32>
    %34 = arith.mulf %33, %20 : vector<8x128xf32>
    %cst_19 = arith.constant dense<0.000000e+00> : vector<8xf32>
    %35 = vector.multi_reduction <add>, %34, %cst_19 [1] : vector<8x128xf32> to vector<8xf32>
    %36 = vector.shape_cast %35 : vector<8xf32> to vector<8x1xf32>
    %cst_20 = arith.constant dense<0xFF800000> : vector<8x128xf32>
    %37 = vector.multi_reduction <maximumf>, %0, %cst_20 [1] : vector<8x4x128xf32> to vector<8x128xf32>
    %38 = vector.shape_cast %37 : vector<8x128xf32> to vector<8x1x128xf32>
    %39 = vector.broadcast %38 : vector<8x1x128xf32> to vector<8x4x128xf32>
    %40 = arith.subf %0, %39 : vector<8x4x128xf32>
    %41 = math.exp %40 : vector<8x4x128xf32>
    %cst_21 = arith.constant dense<0.000000e+00> : vector<8x128xf32>
    %42 = vector.multi_reduction <add>, %41, %cst_21 [1] : vector<8x4x128xf32> to vector<8x128xf32>
    %43 = math.log %42 : vector<8x128xf32>
    %44 = vector.shape_cast %38 : vector<8x1x128xf32> to vector<8x128xf32>
    %45 = arith.addf %43, %44 : vector<8x128xf32>
    %46 = tpu.iota {dimensions = array<i32: 1>} : vector<1x4x128xi32>
    %47 = vector.broadcast %46 : vector<1x4x128xi32> to vector<8x4x128xi32>
    %48 = vector.broadcast %14 : vector<8x1x128xi32> to vector<8x4x128xi32>
    %49 = arith.cmpi eq, %47, %48 : vector<8x4x128xi32>
    %c0_i32_22 = arith.constant 0 : i32
    %50 = arith.sitofp %c0_i32_22 : i32 to f32
    %51 = vector.broadcast %50 : f32 to vector<8x4x128xf32>
    %52 = arith.select %49, %0, %51 : vector<8x4x128xi1>, vector<8x4x128xf32>
    %cst_23 = arith.constant dense<0.000000e+00> : vector<8x128xf32>
    %53 = vector.multi_reduction <add>, %52, %cst_23 [1] : vector<8x4x128xf32> to vector<8x128xf32>
    %54 = arith.subf %45, %53 : vector<8x128xf32>
    %cst_24 = arith.constant 0.000000e+00 : f32
    %55 = vector.shape_cast %5 : vector<1x128xi1> to vector<1x128xi1>
    %56 = vector.broadcast %55 : vector<1x128xi1> to vector<8x128xi1>
    %57 = vector.broadcast %cst_24 : f32 to vector<8x128xf32>
    %58 = arith.select %56, %54, %57 : vector<8x128xi1>, vector<8x128xf32>
    %cst_25 = arith.constant 0.000000e+00 : f32
    %59 = vector.broadcast %cst_25 : f32 to vector<8x128xf32>
    %60 = arith.select %18, %59, %58 : vector<8x128xi1>, vector<8x128xf32>
    %cst_26 = arith.constant 3.000000e+00 : f32
    %61 = vector.broadcast %cst_26 : f32 to vector<8x1xf32>
    %62 = arith.mulf %61, %22 : vector<8x1xf32>
    %cst_27 = arith.constant 1.500000e+01 : f32
    %63 = vector.broadcast %cst_27 : f32 to vector<8x1xf32>
    %64 = arith.minimumf %62, %63 : vector<8x1xf32>
    %cst_28 = arith.constant -1.000000e+00 : f32
    %65 = vector.broadcast %cst_28 : f32 to vector<8x1xf32>
    %cst_29 = arith.constant dense<0xFF800000> : vector<8xf32>
    %66 = vector.multi_reduction <maximumf>, %60, %cst_29 [1] : vector<8x128xf32> to vector<8xf32>
    %67 = vector.shape_cast %66 : vector<8xf32> to vector<8x1xf32>
    %cst_30 = arith.constant 1.000000e+00 : f32
    %68 = vector.broadcast %cst_30 : f32 to vector<8x1xf32>
    %69 = arith.addf %67, %68 : vector<8x1xf32>
    %c0_i32_31 = arith.constant 0 : i32
    %c24_i32 = arith.constant 24 : i32
    %70 = arith.addi %c0_i32_31, %c24_i32 : i32
    %c1_i32 = arith.constant 1 : i32
    %71:2 = scf.for %arg5 = %c0_i32_31 to %70 step %c1_i32 iter_args(%arg6 = %65, %arg7 = %69) -> (vector<8x1xf32>, vector<8x1xf32>)  : i32 {
      %112 = arith.addf %arg6, %arg7 : vector<8x1xf32>
      %cst_43 = arith.constant 5.000000e-01 : f32
      %113 = vector.broadcast %cst_43 : f32 to vector<8x1xf32>
      %114 = arith.mulf %113, %112 : vector<8x1xf32>
      %115 = vector.broadcast %114 : vector<8x1xf32> to vector<8x128xf32>
      %116 = arith.cmpf ogt, %60, %115 : vector<8x128xf32>
      %117 = arith.extui %116 : vector<8x128xi1> to vector<8x128xi32>
      %118 = arith.sitofp %117 : vector<8x128xi32> to vector<8x128xf32>
      %cst_44 = arith.constant dense<0.000000e+00> : vector<8xf32>
      %119 = vector.multi_reduction <add>, %118, %cst_44 [1] : vector<8x128xf32> to vector<8xf32>
      %120 = vector.shape_cast %119 : vector<8xf32> to vector<8x1xf32>
      %121 = arith.cmpf ogt, %120, %64 : vector<8x1xf32>
      %122 = arith.select %121, %114, %arg6 : vector<8x1xi1>, vector<8x1xf32>
      %123 = arith.select %121, %arg7, %114 : vector<8x1xi1>, vector<8x1xf32>
      scf.yield %122, %123 : vector<8x1xf32>, vector<8x1xf32>
    }
    %72 = vector.broadcast %71#1 : vector<8x1xf32> to vector<8x128xf32>
    %73 = arith.cmpf ogt, %60, %72 : vector<8x128xf32>
    %74 = arith.extui %73 : vector<8x128xi1> to vector<8x128xi32>
    %75 = arith.sitofp %74 : vector<8x128xi32> to vector<8x128xf32>
    %cst_32 = arith.constant dense<0.000000e+00> : vector<8xf32>
    %76 = vector.multi_reduction <add>, %75, %cst_32 [1] : vector<8x128xf32> to vector<8xf32>
    %77 = vector.shape_cast %76 : vector<8xf32> to vector<8x1xf32>
    %78 = arith.mulf %60, %75 : vector<8x128xf32>
    %cst_33 = arith.constant dense<0.000000e+00> : vector<8xf32>
    %79 = vector.multi_reduction <add>, %78, %cst_33 [1] : vector<8x128xf32> to vector<8xf32>
    %80 = vector.shape_cast %79 : vector<8xf32> to vector<8x1xf32>
    %cst_34 = arith.constant 0.000000e+00 : f32
    %81 = vector.broadcast %cst_34 : f32 to vector<8x128xf32>
    %82 = arith.select %73, %81, %60 : vector<8x128xi1>, vector<8x128xf32>
    %cst_35 = arith.constant dense<0xFF800000> : vector<8xf32>
    %83 = vector.multi_reduction <maximumf>, %82, %cst_35 [1] : vector<8x128xf32> to vector<8xf32>
    %84 = vector.shape_cast %83 : vector<8xf32> to vector<8x1xf32>
    %85 = arith.subf %64, %77 : vector<8x1xf32>
    %cst_36 = arith.constant 0.000000e+00 : f32
    %86 = vector.broadcast %cst_36 : f32 to vector<8x1xf32>
    %87 = arith.maximumf %85, %86 : vector<8x1xf32>
    %88 = arith.mulf %58, %20 : vector<8x128xf32>
    %cst_37 = arith.constant dense<0.000000e+00> : vector<8xf32>
    %89 = vector.multi_reduction <add>, %88, %cst_37 [1] : vector<8x128xf32> to vector<8xf32>
    %90 = vector.shape_cast %89 : vector<8xf32> to vector<8x1xf32>
    %91 = arith.addf %90, %80 : vector<8x1xf32>
    %92 = arith.mulf %87, %84 : vector<8x1xf32>
    %93 = arith.addf %91, %92 : vector<8x1xf32>
    %94 = tpu.iota {dimensions = array<i32: 1>} : vector<8x128xi32>
    %c0_i32_38 = arith.constant 0 : i32
    %95 = vector.broadcast %c0_i32_38 : i32 to vector<8x128xi32>
    %96 = arith.cmpi eq, %94, %95 : vector<8x128xi32>
    %c1_i32_39 = arith.constant 1 : i32
    %97 = vector.broadcast %c1_i32_39 : i32 to vector<8x128xi32>
    %98 = arith.cmpi eq, %94, %97 : vector<8x128xi32>
    %c2_i32 = arith.constant 2 : i32
    %99 = vector.broadcast %c2_i32 : i32 to vector<8x128xi32>
    %100 = arith.cmpi eq, %94, %99 : vector<8x128xi32>
    %cst_40 = arith.constant 0.000000e+00 : f32
    %101 = vector.shape_cast %22 : vector<8x1xf32> to vector<8x1xf32>
    %102 = vector.broadcast %101 : vector<8x1xf32> to vector<8x128xf32>
    %103 = vector.broadcast %cst_40 : f32 to vector<8x128xf32>
    %104 = arith.select %100, %102, %103 : vector<8x128xi1>, vector<8x128xf32>
    %105 = vector.shape_cast %93 : vector<8x1xf32> to vector<8x1xf32>
    %106 = vector.broadcast %105 : vector<8x1xf32> to vector<8x128xf32>
    %107 = arith.select %98, %106, %104 : vector<8x128xi1>, vector<8x128xf32>
    %108 = vector.shape_cast %36 : vector<8x1xf32> to vector<8x1xf32>
    %109 = vector.broadcast %108 : vector<8x1xf32> to vector<8x128xf32>
    %110 = arith.select %96, %109, %107 : vector<8x128xi1>, vector<8x128xf32>
    %c0_41 = arith.constant 0 : index
    %c0_42 = arith.constant 0 : index
    %111 = vector.load %arg4[%c0_41, %c0_42] : memref<8x128xf32, #tpu.memory_space<vmem>>, vector<8x128xf32>
    tpu.vector_store %arg4[%c0_41, %c0_42], %110 {strides = array<i32>} : memref<8x128xf32, #tpu.memory_space<vmem>>, vector<8x128xf32>,
    return
  }
  func.func @transform_0(%arg0: i32) -> (i32, i32, i32) {
    %c0_i32 = arith.constant 0 : i32
    %c0_i32_0 = arith.constant 0 : i32
    %c0_i32_1 = arith.constant 0 : i32
    return %arg0, %c0_i32, %c0_i32_0 : i32, i32, i32
  }
  func.func @transform_1(%arg0: i32) -> (i32, i32, i32) {
    %c0_i32 = arith.constant 0 : i32
    %c0_i32_0 = arith.constant 0 : i32
    %c0_i32_1 = arith.constant 0 : i32
    return %arg0, %c0_i32, %c0_i32_0 : i32, i32, i32
  }
  func.func @transform_2(%arg0: i32) -> (i32, i32, i32) {
    %c0_i32 = arith.constant 0 : i32
    %c0_i32_0 = arith.constant 0 : i32
    %c0_i32_1 = arith.constant 0 : i32
    return %arg0, %c0_i32, %c0_i32_0 : i32, i32, i32
  }
  func.func @transform_3(%arg0: i32) -> (i32, i32) {
    %c0_i32 = arith.constant 0 : i32
    %c0_i32_0 = arith.constant 0 : i32
    return %arg0, %c0_i32 : i32, i32
  }
}

</mosaic_0001>

<llo_original>
// kernel: tpu_custom_call.1
$region0: #{tpu_custom_call.1}
  #allocation0 [shape = 'u32[]', space=smem, size = 0x4, offset = 0x4, fixed_abs, tag = 'smem constant byte address 0x4 - core index']
  #allocation1 [shape = 'u32[72,128]{1,0:T(1,128)}', space=vmem, size = 0x9000, scoped, tag = 'internal scratch']
  %s0 = inlined_call_operand.vmem [shape: f32[8,4,128], index: 0, kind: input, shape index: {}]
  %s1 = inlined_call_operand.vmem [shape: f32[8,4,128], index: 1, kind: input, shape index: {}]
  %s2 = inlined_call_operand.vmem [shape: f32[8,5,128], index: 2, kind: input, shape index: {}]
  %s3 = inlined_call_operand.hbm [shape: f32[8,128], index: 3, kind: output, shape index: {}]
  %s4 = sld [smem:[#allocation0]]
  $region29: #{tpu_custom_call.1} parent=0
    _
  %s6 = ssub.s32 1, %s4
  %s7 = scalar_select 0, %s6, %s4
  $region1: #{tpu_custom_call.1} parent=0
    #allocation2 [shape = 'u8[4096]{0}', space=vmem, size = 0x1000, scoped, tag = 'output window, operand 0, single buffered']
    #allocation3 [shape = 's32[1]{0}', space=sflag, size = 0x4, scoped, tag = 'scoped memory for tpu_custom_call.1']
    %8 = vsyncpa [#allocation3], 0
    // Predicated region
    $region2: #{tpu_custom_call.1} parent=1 // pred_check
      _
    $region3: #{tpu_custom_call.1} parent=1 // pred_check_branch
      %10 = sbr.rel (0) target = $region5
    $region4: #{tpu_custom_call.1} parent=1 // pred_region
      _
    $region5: #{tpu_custom_call.1} parent=1 // pred_fallthru
      _
    // Predicated region
    $region6: #{tpu_custom_call.1} parent=1 // pred_check
      _
    $region7: #{tpu_custom_call.1} parent=1 // pred_check_branch
      %12 = sbr.rel (0) target = $region9
    $region8: #{tpu_custom_call.1} parent=1 // pred_region
      _
    $region9: #{tpu_custom_call.1} parent=1 // pred_fallthru
      _
    // Predicated region
    $region10: #{tpu_custom_call.1} parent=1 // pred_check
      _
    $region11: #{tpu_custom_call.1} parent=1 // pred_check_branch
      %14 = sbr.rel (0) target = $region13
    $region12: #{tpu_custom_call.1} parent=1 // pred_region
      _
    $region13: #{tpu_custom_call.1} parent=1 // pred_fallthru
      _
    %v15 = vld [vmem:[%s1] sm:$0xf]
    %v16 = vld [vmem:[%s1 + $0x4] sm:$0xf]
    %v17 = vld [vmem:[%s1 + $0x8] sm:$0xf]
    %v18 = vld [vmem:[%s1 + $0xc] sm:$0xf]
    %v19 = vld [vmem:[%s1 + $0x10] sm:$0xf]
    %v20 = vld [vmem:[%s1 + $0x14] sm:$0xf]
    %v21 = vld [vmem:[%s1 + $0x18] sm:$0xf]
    %v22 = vld [vmem:[%s1 + $0x1c] sm:$0xf]
    %v23 = vld [vmem:[%s0] sm:$0xf]
    %v24 = vld [vmem:[%s0 + $0x4] sm:$0xf]
    %v25 = vld [vmem:[%s0 + $0x8] sm:$0xf]
    %v26 = vld [vmem:[%s0 + $0xc] sm:$0xf]
    %v27 = vld [vmem:[%s0 + $0x10] sm:$0xf]
    %v28 = vld [vmem:[%s0 + $0x14] sm:$0xf]
    %v29 = vld [vmem:[%s0 + $0x18] sm:$0xf]
    %v30 = vld [vmem:[%s0 + $0x1c] sm:$0xf]
    %v31 = vld [vmem:[%s2 + $0x1] sm:$0xf]
    %v32 = vld [vmem:[%s2 + $0x9] sm:$0xf]
    %v33 = vld [vmem:[%s2 + $0x11] sm:$0xf]
    %v34 = vld [vmem:[%s2 + $0x19] sm:$0xf]
    %v35 = vld [vmem:[%s2 + $0x21] sm:$0xf]
    %v36 = vld [vmem:[%s2 + $0x29] sm:$0xf]
    %v37 = vld [vmem:[%s2 + $0x31] sm:$0xf]
    %v38 = vld [vmem:[%s2 + $0x39] sm:$0xf]
    %v39 = vlaneseq
    %v40 = vand.u32 %v39, 127
    %vm41 = vcmp.lt.s32.totalorder %v40, 16
    %v42 = vld [vmem:[%s2] sm:$0x1]
    %v43 = vld [vmem:[%s2 + $0x8] sm:$0x1]
    %v44 = vld [vmem:[%s2 + $0x10] sm:$0x1]
    %v45 = vld [vmem:[%s2 + $0x18] sm:$0x1]
    %v46 = vld [vmem:[%s2 + $0x20] sm:$0x1]
    %v47 = vld [vmem:[%s2 + $0x28] sm:$0x1]
    %v48 = vld [vmem:[%s2 + $0x30] sm:$0x1]
    %v49 = vld [vmem:[%s2 + $0x38] sm:$0x1]
    %v50 = vadd.f32 %v42, 0.5
    %v51 = vadd.f32 %v43, 0.5
    %v52 = vadd.f32 %v44, 0.5
    %v53 = vadd.f32 %v45, 0.5
    %v54 = vadd.f32 %v46, 0.5
    %v55 = vadd.f32 %v47, 0.5
    %v56 = vadd.f32 %v48, 0.5
    %v57 = vadd.f32 %v49, 0.5
    %v58 = vcvt.f32.s32.to.zero.pseudo %v50
    %v59 = vcvt.f32.s32.to.zero.pseudo %v51
    %v60 = vcvt.f32.s32.to.zero.pseudo %v52
    %v61 = vcvt.f32.s32.to.zero.pseudo %v53
    %v62 = vcvt.f32.s32.to.zero.pseudo %v54
    %v63 = vcvt.f32.s32.to.zero.pseudo %v55
    %v64 = vcvt.f32.s32.to.zero.pseudo %v56
    %v65 = vcvt.f32.s32.to.zero.pseudo %v57
    %vm66 = vcmp.gt.s32.totalorder %v58, 0
    %vm67 = vcmp.gt.s32.totalorder %v59, 0
    %vm68 = vcmp.gt.s32.totalorder %v60, 0
    %vm69 = vcmp.gt.s32.totalorder %v61, 0
    %vm70 = vcmp.gt.s32.totalorder %v62, 0
    %vm71 = vcmp.gt.s32.totalorder %v63, 0
    %vm72 = vcmp.gt.s32.totalorder %v64, 0
    %vm73 = vcmp.gt.s32.totalorder %v65, 0
    %v74 = vsel %vm41, 1, 0
    %vm75 = vcmp.eq.s32.totalorder %v74, 1
    %vm76 = vmand %vm66, %vm75
    %vm77 = vmand %vm67, %vm75
    %vm78 = vmand %vm68, %vm75
    %vm79 = vmand %vm69, %vm75
    %vm80 = vmand %vm70, %vm75
    %vm81 = vmand %vm71, %vm75
    %vm82 = vmand %vm72, %vm75
    %vm83 = vmand %vm73, %vm75
    %v84 = vsel %vm76, 1, 0
    %v85 = vsel %vm77, 1, 0
    %v86 = vsel %vm78, 1, 0
    %v87 = vsel %vm79, 1, 0
    %v88 = vsel %vm80, 1, 0
    %v89 = vsel %vm81, 1, 0
    %v90 = vsel %vm82, 1, 0
    %v91 = vsel %vm83, 1, 0
    %v92 = vcvt.s32.f32 %v84
    %v93 = vcvt.s32.f32 %v85
    %v94 = vcvt.s32.f32 %v86
    %v95 = vcvt.s32.f32 %v87
    %v96 = vcvt.s32.f32 %v88
    %v97 = vcvt.s32.f32 %v89
    %v98 = vcvt.s32.f32 %v90
    %v99 = vcvt.s32.f32 %v91
    %v108 = vrot.slane %v93, 7
    %vm109 = vcmask 1041409
    %v110 = vsel %vm109, %v108, %v92
    %v111 = vrot.slane %v94, 6
    %vm112 = vcmask 1042434
    %v113 = vsel %vm112, %v111, %v110
    %v114 = vrot.slane %v95, 5
    %vm115 = vcmask 1043459
    %v116 = vsel %vm115, %v114, %v113
    %v117 = vrot.slane %v96, 4
    %vm118 = vcmask 1044484
    %v119 = vsel %vm118, %v117, %v116
    %v120 = vrot.slane %v97, 3
    %vm121 = vcmask 1045509
    %v122 = vsel %vm121, %v120, %v119
    %v123 = vrot.slane %v98, 2
    %vm124 = vcmask 1046534
    %v125 = vsel %vm124, %v123, %v122
    %v126 = vrot.slane %v99, 1
    %vm127 = vcmask 1047559
    %v128 = vsel %vm127, %v126, %v125
    %130 = vadd.xlane.f32.xlu0 %v128
    %v131 = vpop.xlane.xlu0 %130
    %v132 = vsub.f32 %v23, %v31
    %v133 = vsub.f32 %v24, %v32
    %v134 = vsub.f32 %v25, %v33
    %v135 = vsub.f32 %v26, %v34
    %v136 = vsub.f32 %v27, %v35
    %v137 = vsub.f32 %v28, %v36
    %v138 = vsub.f32 %v29, %v37
    %v139 = vsub.f32 %v30, %v38
    %v140 = vand.u32 2147483647, %v132
    %v141 = vand.u32 2147483647, %v133
    %v142 = vand.u32 2147483647, %v134
    %v143 = vand.u32 2147483647, %v135
    %v144 = vand.u32 2147483647, %v136
    %v145 = vand.u32 2147483647, %v137
    %v146 = vand.u32 2147483647, %v138
    %v147 = vand.u32 2147483647, %v139
    %vm148 = vcmp.lt.f32.partialorder %v140, 1.0
    %vm149 = vcmp.lt.f32.partialorder %v141, 1.0
    %vm150 = vcmp.lt.f32.partialorder %v142, 1.0
    %vm151 = vcmp.lt.f32.partialorder %v143, 1.0
    %vm152 = vcmp.lt.f32.partialorder %v144, 1.0
    %vm153 = vcmp.lt.f32.partialorder %v145, 1.0
    %vm154 = vcmp.lt.f32.partialorder %v146, 1.0
    %vm155 = vcmp.lt.f32.partialorder %v147, 1.0
    %v156 = vmul.f32 %v132, 0.5
    %v157 = vmul.f32 %v133, 0.5
    %v158 = vmul.f32 %v134, 0.5
    %v159 = vmul.f32 %v135, 0.5
    %v160 = vmul.f32 %v136, 0.5
    %v161 = vmul.f32 %v137, 0.5
    %v162 = vmul.f32 %v138, 0.5
    %v163 = vmul.f32 %v139, 0.5
    %v164 = vmul.f32 %v156, %v132
    %v165 = vmul.f32 %v157, %v133
    %v166 = vmul.f32 %v158, %v134
    %v167 = vmul.f32 %v159, %v135
    %v168 = vmul.f32 %v160, %v136
    %v169 = vmul.f32 %v161, %v137
    %v170 = vmul.f32 %v162, %v138
    %v171 = vmul.f32 %v163, %v139
    %v172 = vsub.f32 %v140, 0.5
    %v173 = vsub.f32 %v141, 0.5
    %v174 = vsub.f32 %v142, 0.5
    %v175 = vsub.f32 %v143, 0.5
    %v176 = vsub.f32 %v144, 0.5
    %v177 = vsub.f32 %v145, 0.5
    %v178 = vsub.f32 %v146, 0.5
    %v179 = vsub.f32 %v147, 0.5
    %v180 = vsel %vm148, %v164, %v172
    %v181 = vsel %vm149, %v165, %v173
    %v182 = vsel %vm150, %v166, %v174
    %v183 = vsel %vm151, %v167, %v175
    %v184 = vsel %vm152, %v168, %v176
    %v185 = vsel %vm153, %v169, %v177
    %v186 = vsel %vm154, %v170, %v178
    %v187 = vsel %vm155, %v171, %v179
    %vm188 = vcmask 1043456
    %v189 = vsel %vm188, %v180, 0.0
    %v190 = vrot.slane %v189, 4
    %v191 = vadd.f32 %v189, %v190
    %v192 = vrot.slane %v191, 2
    %v193 = vadd.f32 %v191, %v192
    %v194 = vrot.slane %v193, 1
    %v195 = vadd.f32 %v193, %v194
    %v196 = vsel %vm188, %v181, 0.0
    %v197 = vrot.slane %v196, 4
    %v198 = vadd.f32 %v196, %v197
    %v199 = vrot.slane %v198, 2
    %v200 = vadd.f32 %v198, %v199
    %v201 = vrot.slane %v200, 1
    %v202 = vadd.f32 %v200, %v201
    %v203 = vsel %vm188, %v182, 0.0
    %v204 = vrot.slane %v203, 4
    %v205 = vadd.f32 %v203, %v204
    %v206 = vrot.slane %v205, 2
    %v207 = vadd.f32 %v205, %v206
    %v208 = vrot.slane %v207, 1
    %v209 = vadd.f32 %v207, %v208
    %v210 = vsel %vm188, %v183, 0.0
    %v211 = vrot.slane %v210, 4
    %v212 = vadd.f32 %v210, %v211
    %v213 = vrot.slane %v212, 2
    %v214 = vadd.f32 %v212, %v213
    %v215 = vrot.slane %v214, 1
    %v216 = vadd.f32 %v214, %v215
    %v217 = vsel %vm188, %v184, 0.0
    %v218 = vrot.slane %v217, 4
    %v219 = vadd.f32 %v217, %v218
    %v220 = vrot.slane %v219, 2
    %v221 = vadd.f32 %v219, %v220
    %v222 = vrot.slane %v221, 1
    %v223 = vadd.f32 %v221, %v222
    %v224 = vsel %vm188, %v185, 0.0
    %v225 = vrot.slane %v224, 4
    %v226 = vadd.f32 %v224, %v225
    %v227 = vrot.slane %v226, 2
    %v228 = vadd.f32 %v226, %v227
    %v229 = vrot.slane %v228, 1
    %v230 = vadd.f32 %v228, %v229
    %v231 = vsel %vm188, %v186, 0.0
    %v232 = vrot.slane %v231, 4
    %v233 = vadd.f32 %v231, %v232
    %v234 = vrot.slane %v233, 2
    %v235 = vadd.f32 %v233, %v234
    %v236 = vrot.slane %v235, 1
    %v237 = vadd.f32 %v235, %v236
    %v238 = vsel %vm188, %v187, 0.0
    %v239 = vrot.slane %v238, 4
    %v240 = vadd.f32 %v238, %v239
    %v241 = vrot.slane %v240, 2
    %v242 = vadd.f32 %v240, %v241
    %v243 = vrot.slane %v242, 1
    %v244 = vadd.f32 %v242, %v243
    %v245 = vmul.f32 %v195, %v92
    %v246 = vmul.f32 %v202, %v93
    %v247 = vmul.f32 %v209, %v94
    %v248 = vmul.f32 %v216, %v95
    %v249 = vmul.f32 %v223, %v96
    %v250 = vmul.f32 %v230, %v97
    %v251 = vmul.f32 %v237, %v98
    %v252 = vmul.f32 %v244, %v99
    %v261 = vrot.slane %v246, 7
    %v262 = vsel %vm109, %v261, %v245
    %v263 = vrot.slane %v247, 6
    %v264 = vsel %vm112, %v263, %v262
    %v265 = vrot.slane %v248, 5
    %v266 = vsel %vm115, %v265, %v264
    %v267 = vrot.slane %v249, 4
    %v268 = vsel %vm118, %v267, %v266
    %v269 = vrot.slane %v250, 3
    %v270 = vsel %vm121, %v269, %v268
    %v271 = vrot.slane %v251, 2
    %v272 = vsel %vm124, %v271, %v270
    %v273 = vrot.slane %v252, 1
    %v274 = vsel %vm127, %v273, %v272
    %276 = vadd.xlane.f32.xlu0 %v274
    %v277 = vpop.xlane.xlu0 %276
    %v278 = vsel %vm188, %v15, -inf
    %v279 = vrot.slane %v278, 4
    %v280 = vmax.f32 %v278, %v279
    %v281 = vrot.slane %v280, 2
    %v282 = vmax.f32 %v280, %v281
    %v283 = vrot.slane %v282, 1
    %v284 = vmax.f32 %v282, %v283
    %v285 = vsel %vm188, %v16, -inf
    %v286 = vrot.slane %v285, 4
    %v287 = vmax.f32 %v285, %v286
    %v288 = vrot.slane %v287, 2
    %v289 = vmax.f32 %v287, %v288
    %v290 = vrot.slane %v289, 1
    %v291 = vmax.f32 %v289, %v290
    %v292 = vsel %vm188, %v17, -inf
    %v293 = vrot.slane %v292, 4
    %v294 = vmax.f32 %v292, %v293
    %v295 = vrot.slane %v294, 2
    %v296 = vmax.f32 %v294, %v295
    %v297 = vrot.slane %v296, 1
    %v298 = vmax.f32 %v296, %v297
    %v299 = vsel %vm188, %v18, -inf
    %v300 = vrot.slane %v299, 4
    %v301 = vmax.f32 %v299, %v300
    %v302 = vrot.slane %v301, 2
    %v303 = vmax.f32 %v301, %v302
    %v304 = vrot.slane %v303, 1
    %v305 = vmax.f32 %v303, %v304
    %v306 = vsel %vm188, %v19, -inf
    %v307 = vrot.slane %v306, 4
    %v308 = vmax.f32 %v306, %v307
    %v309 = vrot.slane %v308, 2
    %v310 = vmax.f32 %v308, %v309
    %v311 = vrot.slane %v310, 1
    %v312 = vmax.f32 %v310, %v311
    %v313 = vsel %vm188, %v20, -inf
    %v314 = vrot.slane %v313, 4
    %v315 = vmax.f32 %v313, %v314
    %v316 = vrot.slane %v315, 2
    %v317 = vmax.f32 %v315, %v316
    %v318 = vrot.slane %v317, 1
    %v319 = vmax.f32 %v317, %v318
    %v320 = vsel %vm188, %v21, -inf
    %v321 = vrot.slane %v320, 4
    %v322 = vmax.f32 %v320, %v321
    %v323 = vrot.slane %v322, 2
    %v324 = vmax.f32 %v322, %v323
    %v325 = vrot.slane %v324, 1
    %v326 = vmax.f32 %v324, %v325
    %v327 = vsel %vm188, %v22, -inf
    %v328 = vrot.slane %v327, 4
    %v329 = vmax.f32 %v327, %v328
    %v330 = vrot.slane %v329, 2
    %v331 = vmax.f32 %v329, %v330
    %v332 = vrot.slane %v331, 1
    %v333 = vmax.f32 %v331, %v332
    %v334 = vsub.f32 %v15, %v284
    %v335 = vsub.f32 %v16, %v291
    %v336 = vsub.f32 %v17, %v298
    %v337 = vsub.f32 %v18, %v305
    %v338 = vsub.f32 %v19, %v312
    %v339 = vsub.f32 %v20, %v319
    %v340 = vsub.f32 %v21, %v326
    %v341 = vsub.f32 %v22, %v333
    %v342 = vmul.f32 %v334, 1.442695
    %v343 = vpow.pop %v342
    %v344 = vmul.f32 %v335, 1.442695
    %v345 = vpow.pop %v344
    %v346 = vmul.f32 %v336, 1.442695
    %v347 = vpow.pop %v346
    %v348 = vmul.f32 %v337, 1.442695
    %v349 = vpow.pop %v348
    %v350 = vmul.f32 %v338, 1.442695
    %v351 = vpow.pop %v350
    %v352 = vmul.f32 %v339, 1.442695
    %v353 = vpow.pop %v352
    %v354 = vmul.f32 %v340, 1.442695
    %v355 = vpow.pop %v354
    %v356 = vmul.f32 %v341, 1.442695
    %v357 = vpow.pop %v356
    %v358 = vsel %vm188, %v343, 0.0
    %v359 = vrot.slane %v358, 4
    %v360 = vadd.f32 %v358, %v359
    %v361 = vrot.slane %v360, 2
    %v362 = vadd.f32 %v360, %v361
    %v363 = vrot.slane %v362, 1
    %v364 = vadd.f32 %v362, %v363
    %v365 = vsel %vm188, %v345, 0.0
    %v366 = vrot.slane %v365, 4
    %v367 = vadd.f32 %v365, %v366
    %v368 = vrot.slane %v367, 2
    %v369 = vadd.f32 %v367, %v368
    %v370 = vrot.slane %v369, 1
    %v371 = vadd.f32 %v369, %v370
    %v372 = vsel %vm188, %v347, 0.0
    %v373 = vrot.slane %v372, 4
    %v374 = vadd.f32 %v372, %v373
    %v375 = vrot.slane %v374, 2
    %v376 = vadd.f32 %v374, %v375
    %v377 = vrot.slane %v376, 1
    %v378 = vadd.f32 %v376, %v377
    %v379 = vsel %vm188, %v349, 0.0
    %v380 = vrot.slane %v379, 4
    %v381 = vadd.f32 %v379, %v380
    %v382 = vrot.slane %v381, 2
    %v383 = vadd.f32 %v381, %v382
    %v384 = vrot.slane %v383, 1
    %v385 = vadd.f32 %v383, %v384
    %v386 = vsel %vm188, %v351, 0.0
    %v387 = vrot.slane %v386, 4
    %v388 = vadd.f32 %v386, %v387
    %v389 = vrot.slane %v388, 2
    %v390 = vadd.f32 %v388, %v389
    %v391 = vrot.slane %v390, 1
    %v392 = vadd.f32 %v390, %v391
    %v393 = vsel %vm188, %v353, 0.0
    %v394 = vrot.slane %v393, 4
    %v395 = vadd.f32 %v393, %v394
    %v396 = vrot.slane %v395, 2
    %v397 = vadd.f32 %v395, %v396
    %v398 = vrot.slane %v397, 1
    %v399 = vadd.f32 %v397, %v398
    %v400 = vsel %vm188, %v355, 0.0
    %v401 = vrot.slane %v400, 4
    %v402 = vadd.f32 %v400, %v401
    %v403 = vrot.slane %v402, 2
    %v404 = vadd.f32 %v402, %v403
    %v405 = vrot.slane %v404, 1
    %v406 = vadd.f32 %v404, %v405
    %v407 = vsel %vm188, %v357, 0.0
    %v408 = vrot.slane %v407, 4
    %v409 = vadd.f32 %v407, %v408
    %v410 = vrot.slane %v409, 2
    %v411 = vadd.f32 %v409, %v410
    %v412 = vrot.slane %v411, 1
    %v413 = vadd.f32 %v411, %v412
    %v414 = vlog2.pop %v364
    %v415 = vmul.f32 %v414, 0.6931472
    %v416 = vlog2.pop %v371
    %v417 = vmul.f32 %v416, 0.6931472
    %v418 = vlog2.pop %v378
    %v419 = vmul.f32 %v418, 0.6931472
    %v420 = vlog2.pop %v385
    %v421 = vmul.f32 %v420, 0.6931472
    %v422 = vlog2.pop %v392
    %v423 = vmul.f32 %v422, 0.6931472
    %v424 = vlog2.pop %v399
    %v425 = vmul.f32 %v424, 0.6931472
    %v426 = vlog2.pop %v406
    %v427 = vmul.f32 %v426, 0.6931472
    %v428 = vlog2.pop %v413
    %v429 = vmul.f32 %v428, 0.6931472
    %v430 = vadd.f32 %v415, %v284
    %v431 = vadd.f32 %v417, %v291
    %v432 = vadd.f32 %v419, %v298
    %v433 = vadd.f32 %v421, %v305
    %v434 = vadd.f32 %v423, %v312
    %v435 = vadd.f32 %v425, %v319
    %v436 = vadd.f32 %v427, %v326
    %v437 = vadd.f32 %v429, %v333
    %v438 = vlaneseq
    %v439 = vshrl.u32 %v438, 7
    %v440 = vperm.slane %v58, 0
    %v441 = vperm.slane %v59, 0
    %v442 = vperm.slane %v60, 0
    %v443 = vperm.slane %v61, 0
    %v444 = vperm.slane %v62, 0
    %v445 = vperm.slane %v63, 0
    %v446 = vperm.slane %v64, 0
    %v447 = vperm.slane %v65, 0
    %vm448 = vcmp.eq.s32.totalorder %v439, %v440
    %vm449 = vcmp.eq.s32.totalorder %v439, %v441
    %vm450 = vcmp.eq.s32.totalorder %v439, %v442
    %vm451 = vcmp.eq.s32.totalorder %v439, %v443
    %vm452 = vcmp.eq.s32.totalorder %v439, %v444
    %vm453 = vcmp.eq.s32.totalorder %v439, %v445
    %vm454 = vcmp.eq.s32.totalorder %v439, %v446
    %vm455 = vcmp.eq.s32.totalorder %v439, %v447
    %v456 = vsel %vm448, %v15, 0.0
    %v457 = vsel %vm449, %v16, 0.0
    %v458 = vsel %vm450, %v17, 0.0
    %v459 = vsel %vm451, %v18, 0.0
    %v460 = vsel %vm452, %v19, 0.0
    %v461 = vsel %vm453, %v20, 0.0
    %v462 = vsel %vm454, %v21, 0.0
    %v463 = vsel %vm455, %v22, 0.0
    %v464 = vsel %vm188, %v456, 0.0
    %v465 = vrot.slane %v464, 4
    %v466 = vadd.f32 %v464, %v465
    %v467 = vrot.slane %v466, 2
    %v468 = vadd.f32 %v466, %v467
    %v469 = vrot.slane %v468, 1
    %v470 = vadd.f32 %v468, %v469
    %v471 = vsel %vm188, %v457, 0.0
    %v472 = vrot.slane %v471, 4
    %v473 = vadd.f32 %v471, %v472
    %v474 = vrot.slane %v473, 2
    %v475 = vadd.f32 %v473, %v474
    %v476 = vrot.slane %v475, 1
    %v477 = vadd.f32 %v475, %v476
    %v478 = vsel %vm188, %v458, 0.0
    %v479 = vrot.slane %v478, 4
    %v480 = vadd.f32 %v478, %v479
    %v481 = vrot.slane %v480, 2
    %v482 = vadd.f32 %v480, %v481
    %v483 = vrot.slane %v482, 1
    %v484 = vadd.f32 %v482, %v483
    %v485 = vsel %vm188, %v459, 0.0
    %v486 = vrot.slane %v485, 4
    %v487 = vadd.f32 %v485, %v486
    %v488 = vrot.slane %v487, 2
    %v489 = vadd.f32 %v487, %v488
    %v490 = vrot.slane %v489, 1
    %v491 = vadd.f32 %v489, %v490
    %v492 = vsel %vm188, %v460, 0.0
    %v493 = vrot.slane %v492, 4
    %v494 = vadd.f32 %v492, %v493
    %v495 = vrot.slane %v494, 2
    %v496 = vadd.f32 %v494, %v495
    %v497 = vrot.slane %v496, 1
    %v498 = vadd.f32 %v496, %v497
    %v499 = vsel %vm188, %v461, 0.0
    %v500 = vrot.slane %v499, 4
    %v501 = vadd.f32 %v499, %v500
    %v502 = vrot.slane %v501, 2
    %v503 = vadd.f32 %v501, %v502
    %v504 = vrot.slane %v503, 1
    %v505 = vadd.f32 %v503, %v504
    %v506 = vsel %vm188, %v462, 0.0
    %v507 = vrot.slane %v506, 4
    %v508 = vadd.f32 %v506, %v507
    %v509 = vrot.slane %v508, 2
    %v510 = vadd.f32 %v508, %v509
    %v511 = vrot.slane %v510, 1
    %v512 = vadd.f32 %v510, %v511
    %v513 = vsel %vm188, %v463, 0.0
    %v514 = vrot.slane %v513, 4
    %v515 = vadd.f32 %v513, %v514
    %v516 = vrot.slane %v515, 2
    %v517 = vadd.f32 %v515, %v516
    %v518 = vrot.slane %v517, 1
    %v519 = vadd.f32 %v517, %v518
    %v520 = vsub.f32 %v430, %v470
    %v521 = vsub.f32 %v431, %v477
    %v522 = vsub.f32 %v432, %v484
    %v523 = vsub.f32 %v433, %v491
    %v524 = vsub.f32 %v434, %v498
    %v525 = vsub.f32 %v435, %v505
    %v526 = vsub.f32 %v436, %v512
    %v527 = vsub.f32 %v437, %v519
    %v536 = vsel %vm109, %v521, %v520
    %v537 = vsel %vm112, %v522, %v536
    %v538 = vsel %vm115, %v523, %v537
    %v539 = vsel %vm118, %v524, %v538
    %v540 = vsel %vm121, %v525, %v539
    %v541 = vsel %vm124, %v526, %v540
    %v542 = vsel %vm127, %v527, %v541
    %v544 = vsel %vm75, %v542, 0.0
    %v546 = vrot.slane %v544, 1
    %v547 = vrot.slane %v544, 2
    %v548 = vrot.slane %v544, 3
    %v549 = vrot.slane %v544, 4
    %v550 = vrot.slane %v544, 5
    %v551 = vrot.slane %v544, 6
    %v552 = vrot.slane %v544, 7
    %v561 = vsel %vm76, 0.0, %v544
    %v562 = vsel %vm77, 0.0, %v546
    %v563 = vsel %vm78, 0.0, %v547
    %v564 = vsel %vm79, 0.0, %v548
    %v565 = vsel %vm80, 0.0, %v549
    %v566 = vsel %vm81, 0.0, %v550
    %v567 = vsel %vm82, 0.0, %v551
    %v568 = vsel %vm83, 0.0, %v552
    %v569 = vmul.f32 %v131, 3.0
    %v570 = vmin.f32 %v569, 15.0
    %v579 = vrot.slane %v562, 7
    %v580 = vsel %vm109, %v579, %v561
    %v581 = vrot.slane %v563, 6
    %v582 = vsel %vm112, %v581, %v580
    %v583 = vrot.slane %v564, 5
    %v584 = vsel %vm115, %v583, %v582
    %v585 = vrot.slane %v565, 4
    %v586 = vsel %vm118, %v585, %v584
    %v587 = vrot.slane %v566, 3
    %v588 = vsel %vm121, %v587, %v586
    %v589 = vrot.slane %v567, 2
    %v590 = vsel %vm124, %v589, %v588
    %v591 = vrot.slane %v568, 1
    %v592 = vsel %vm127, %v591, %v590
    %594 = vmax.xlane.f32.xlu0 %v592
    %v595 = vpop.xlane.xlu0 %594
    %v596 = vadd.f32 %v595, 1.0
    loop: start=0, step=1, limit=24
    $region14: #{tpu_custom_call.1} parent=1 // loop_pre_header
      _
    $region15: #{tpu_custom_call.1} parent=1 // loop_header
      %s598 = sphi 0, %s602
      %p599 = scmp.ge.s32.totalorder %s598, 24
      %v603 = vphi -1.0, %v673
      %v604 = vphi %v596, %v674
    $region16: #{tpu_custom_call.1} parent=1 // loop_header_branch
      %601 = sbr.rel (%p599) target = $region20
    $region17: #{tpu_custom_call.1} parent=1 // loop_body
      %v605 = vadd.f32 %v603, %v604
      %v606 = vmul.f32 %v605, 0.5
      %v608 = vrot.slane %v606, 1
      %v609 = vrot.slane %v606, 2
      %v610 = vrot.slane %v606, 3
      %v611 = vrot.slane %v606, 4
      %v612 = vrot.slane %v606, 5
      %v613 = vrot.slane %v606, 6
      %v614 = vrot.slane %v606, 7
      %vm623 = vcmp.gt.f32.partialorder %v561, %v606
      %vm624 = vcmp.gt.f32.partialorder %v562, %v608
      %vm625 = vcmp.gt.f32.partialorder %v563, %v609
      %vm626 = vcmp.gt.f32.partialorder %v564, %v610
      %vm627 = vcmp.gt.f32.partialorder %v565, %v611
      %vm628 = vcmp.gt.f32.partialorder %v566, %v612
      %vm629 = vcmp.gt.f32.partialorder %v567, %v613
      %vm630 = vcmp.gt.f32.partialorder %v568, %v614
      %v631 = vsel %vm623, 1, 0
      %v632 = vsel %vm624, 1, 0
      %v633 = vsel %vm625, 1, 0
      %v634 = vsel %vm626, 1, 0
      %v635 = vsel %vm627, 1, 0
      %v636 = vsel %vm628, 1, 0
      %v637 = vsel %vm629, 1, 0
      %v638 = vsel %vm630, 1, 0
      %v639 = vcvt.s32.f32 %v631
      %v640 = vcvt.s32.f32 %v632
      %v641 = vcvt.s32.f32 %v633
      %v642 = vcvt.s32.f32 %v634
      %v643 = vcvt.s32.f32 %v635
      %v644 = vcvt.s32.f32 %v636
      %v645 = vcvt.s32.f32 %v637
      %v646 = vcvt.s32.f32 %v638
      %v655 = vrot.slane %v640, 7
      %v656 = vsel %vm109, %v655, %v639
      %v657 = vrot.slane %v641, 6
      %v658 = vsel %vm112, %v657, %v656
      %v659 = vrot.slane %v642, 5
      %v660 = vsel %vm115, %v659, %v658
      %v661 = vrot.slane %v643, 4
      %v662 = vsel %vm118, %v661, %v660
      %v663 = vrot.slane %v644, 3
      %v664 = vsel %vm121, %v663, %v662
      %v665 = vrot.slane %v645, 2
      %v666 = vsel %vm124, %v665, %v664
      %v667 = vrot.slane %v646, 1
      %v668 = vsel %vm127, %v667, %v666
      %670 = vadd.xlane.f32.xlu0 %v668
      %v671 = vpop.xlane.xlu0 %670
      %vm672 = vcmp.gt.f32.partialorder %v671, %v570
      %v673 = vsel %vm672, %v606, %v603
      %v674 = vsel %vm672, %v604, %v606
    $region18: #{tpu_custom_call.1} parent=1 // loop_footer
      %s602 = sadd.s32 1, %s598
    $region19: #{tpu_custom_call.1} parent=1 // loop_footer_branch
      %597 = sbr.rel target = $region15
    $region20: #{tpu_custom_call.1} parent=1 // loop_exit
      _
    %v676 = vrot.slane %v604, 1
    %v677 = vrot.slane %v604, 2
    %v678 = vrot.slane %v604, 3
    %v679 = vrot.slane %v604, 4
    %v680 = vrot.slane %v604, 5
    %v681 = vrot.slane %v604, 6
    %v682 = vrot.slane %v604, 7
    %vm691 = vcmp.gt.f32.partialorder %v561, %v604
    %vm692 = vcmp.gt.f32.partialorder %v562, %v676
    %vm693 = vcmp.gt.f32.partialorder %v563, %v677
    %vm694 = vcmp.gt.f32.partialorder %v564, %v678
    %vm695 = vcmp.gt.f32.partialorder %v565, %v679
    %vm696 = vcmp.gt.f32.partialorder %v566, %v680
    %vm697 = vcmp.gt.f32.partialorder %v567, %v681
    %vm698 = vcmp.gt.f32.partialorder %v568, %v682
    %v699 = vsel %vm691, 1, 0
    %v700 = vsel %vm692, 1, 0
    %v701 = vsel %vm693, 1, 0
    %v702 = vsel %vm694, 1, 0
    %v703 = vsel %vm695, 1, 0
    %v704 = vsel %vm696, 1, 0
    %v705 = vsel %vm697, 1, 0
    %v706 = vsel %vm698, 1, 0
    %v707 = vcvt.s32.f32 %v699
    %v708 = vcvt.s32.f32 %v700
    %v709 = vcvt.s32.f32 %v701
    %v710 = vcvt.s32.f32 %v702
    %v711 = vcvt.s32.f32 %v703
    %v712 = vcvt.s32.f32 %v704
    %v713 = vcvt.s32.f32 %v705
    %v714 = vcvt.s32.f32 %v706
    %v723 = vrot.slane %v708, 7
    %v724 = vsel %vm109, %v723, %v707
    %v725 = vrot.slane %v709, 6
    %v726 = vsel %vm112, %v725, %v724
    %v727 = vrot.slane %v710, 5
    %v728 = vsel %vm115, %v727, %v726
    %v729 = vrot.slane %v711, 4
    %v730 = vsel %vm118, %v729, %v728
    %v731 = vrot.slane %v712, 3
    %v732 = vsel %vm121, %v731, %v730
    %v733 = vrot.slane %v713, 2
    %v734 = vsel %vm124, %v733, %v732
    %v735 = vrot.slane %v714, 1
    %v736 = vsel %vm127, %v735, %v734
    %738 = vadd.xlane.f32.xlu0 %v736
    %v739 = vpop.xlane.xlu0 %738
    %v740 = vmul.f32 %v561, %v707
    %v741 = vmul.f32 %v562, %v708
    %v742 = vmul.f32 %v563, %v709
    %v743 = vmul.f32 %v564, %v710
    %v744 = vmul.f32 %v565, %v711
    %v745 = vmul.f32 %v566, %v712
    %v746 = vmul.f32 %v567, %v713
    %v747 = vmul.f32 %v568, %v714
    %v756 = vrot.slane %v741, 7
    %v757 = vsel %vm109, %v756, %v740
    %v758 = vrot.slane %v742, 6
    %v759 = vsel %vm112, %v758, %v757
    %v760 = vrot.slane %v743, 5
    %v761 = vsel %vm115, %v760, %v759
    %v762 = vrot.slane %v744, 4
    %v763 = vsel %vm118, %v762, %v761
    %v764 = vrot.slane %v745, 3
    %v765 = vsel %vm121, %v764, %v763
    %v766 = vrot.slane %v746, 2
    %v767 = vsel %vm124, %v766, %v765
    %v768 = vrot.slane %v747, 1
    %v769 = vsel %vm127, %v768, %v767
    %771 = vadd.xlane.f32.xlu0 %v769
    %v772 = vpop.xlane.xlu0 %771
    %v773 = vsel %vm691, 0.0, %v561
    %v774 = vsel %vm692, 0.0, %v562
    %v775 = vsel %vm693, 0.0, %v563
    %v776 = vsel %vm694, 0.0, %v564
    %v777 = vsel %vm695, 0.0, %v565
    %v778 = vsel %vm696, 0.0, %v566
    %v779 = vsel %vm697, 0.0, %v567
    %v780 = vsel %vm698, 0.0, %v568
    %v789 = vrot.slane %v774, 7
    %v790 = vsel %vm109, %v789, %v773
    %v791 = vrot.slane %v775, 6
    %v792 = vsel %vm112, %v791, %v790
    %v793 = vrot.slane %v776, 5
    %v794 = vsel %vm115, %v793, %v792
    %v795 = vrot.slane %v777, 4
    %v796 = vsel %vm118, %v795, %v794
    %v797 = vrot.slane %v778, 3
    %v798 = vsel %vm121, %v797, %v796
    %v799 = vrot.slane %v779, 2
    %v800 = vsel %vm124, %v799, %v798
    %v801 = vrot.slane %v780, 1
    %v802 = vsel %vm127, %v801, %v800
    %804 = vmax.xlane.f32.xlu0 %v802
    %v805 = vpop.xlane.xlu0 %804
    %v806 = vsub.f32 %v570, %v739
    %v807 = vmax.f32 %v806, 0.0
    %v808 = vmul.f32 %v544, %v128
    %809 = vadd.xlane.f32.xlu0 %v808
    %v810 = vpop.xlane.xlu0 %809
    %v811 = vadd.f32 %v810, %v772
    %v812 = vmul.f32 %v807, %v805
    %v813 = vadd.f32 %v811, %v812
    %vm814 = vcmp.eq.s32.totalorder %v40, 0
    %vm815 = vcmp.eq.s32.totalorder %v40, 1
    %vm816 = vcmp.eq.s32.totalorder %v40, 2
    %v817 = vsel %vm816, %v131, 0.0
    %v818 = vsel %vm815, %v813, %v817
    %v819 = vsel %vm814, %v277, %v818
    %820 = vst [vmem:[#allocation2] sm:$0xff] %v819
    // Predicated region
    $region21: #{tpu_custom_call.1} parent=1 // pred_check
      _
    $region22: #{tpu_custom_call.1} parent=1 // pred_check_branch
      %822 = sbr.rel (0) target = $region24
    $region23: #{tpu_custom_call.1} parent=1 // pred_region
      %824 = vsyncadd [#allocation3], 0
      %s826 = sshll.u32 [#allocation2], 4
      %s827 = int_to_ptr.vmem [resolvable:$true] %s826
      %s828 = sshll.u32 %s3, 4
      %s829 = int_to_ptr.hbm [resolvable:$true] %s828
      %831 = dma.vmem_to_hbm [thread:$0]  %s827, 128, %s829, [#allocation3]
    $region24: #{tpu_custom_call.1} parent=1 // pred_fallthru
      _
    // Predicated region
    $region25: #{tpu_custom_call.1} parent=1 // pred_check
      _
    $region26: #{tpu_custom_call.1} parent=1 // pred_check_branch
      %833 = sbr.rel (0) target = $region28
    $region27: #{tpu_custom_call.1} parent=1 // pred_region
      %835 = dma.done [#allocation3], 128
    $region28: #{tpu_custom_call.1} parent=1 // pred_fallthru
      _
    %836 = vsyncpa [#allocation3], 1

</llo_original>
